<compile_context>
chip_gen: v6e
topology: v6e:2x2x1
jax: 0.10.0
libtpu: 0.0.40
codegen_flags: <defaults>
</compile_context>

<pallas_src>
import functools

import jax
import jax.numpy as jnp
from jax.experimental import pallas as pl
from jax.experimental.pallas import tpu as pltpu


def _round_up(x: int, m: int) -> int:
    return (x + m - 1) // m * m


def mlp_kernel(x_ref, w_ref, b_ref, o_ref):
    # Single fused affine map: y = x @ W + b.  f32 operands, f32 accumulation
    # on the MXU, f32 bias add on the VPU, lane-dense (O_pad = 128k) store.
    acc = jnp.dot(x_ref[...], w_ref[...], preferred_element_type=jnp.float32)
    o_ref[...] = (acc + b_ref[...]).astype(o_ref.dtype)


def prepare_params(w1, b1, w2, b2):
    """Collapse the two activation-free Linears into one affine map and pad
    only the output (lane) dim to a multiple of 128 for unmasked stores.

    Done ONCE per parameter set (outside the per-call path).
      w1: (F, H)  b1: (1, H)  w2: (H, O)  b2: (1, O)   (all f32)
    Returns:
      w_fused: (F, O_pad) f32,  b_fused: (1, O_pad) f32
    """
    o = w2.shape[1]
    w = w1 @ w2            # (F, O) f32
    b = b1 @ w2 + b2       # (1, O) f32
    o_pad = _round_up(o, 128)
    w_fused = jnp.pad(w, ((0, 0), (0, o_pad - o))).astype(jnp.float32)
    b_fused = jnp.pad(b, ((0, 0), (0, o_pad - o))).astype(jnp.float32)
    return w_fused, b_fused


@functools.partial(jax.jit, static_argnames=("out_seq_len",))
def mlp_forward(x, w_fused, b_fused, out_seq_len):
    """x: (batch, F) f32 (already flattened like x.reshape(batch, -1)).
    Returns (batch, out_seq_len) f32."""
    batch, f = x.shape
    f_w, o_pad = w_fused.shape
    assert f == f_w
    assert b_fused.shape == (1, o_pad)
    assert out_seq_len <= o_pad

    # Batch tiling.  At small batch (the spec's batch=2) every block shape
    # equals the full array dims -> no per-call pad/cast of x, grid=(1,).
    if batch <= 1024:
        tile_m = batch
        batch_pad = batch
        x_in = x
    else:
        # Large-batch headroom: weights stay resident, x/out stream.  At least
        # 2 grid steps so v7x's two TensorCores both get work; tile_m multiple
        # of 16 keeps blocks vreg-dense; double-buffered x/out footprint at
        # tile_m=2048 is a few MiB, well inside v7x's 64 MiB VMEM.
        tile_m = min(2048, _round_up(pl.cdiv(batch, 2), 16))
        batch_pad = _round_up(batch, tile_m)
        x_in = jnp.pad(x, ((0, batch_pad - batch), (0, 0))) if batch_pad != batch else x
    num_tiles = batch_pad // tile_m

    if num_tiles > 1:
        # Constant index_map -> single-buffer the invariant weight/bias blocks
        # (halves their resident VMEM once the fused W grows).
        w_spec = pl.BlockSpec((f, o_pad), lambda i: (0, 0),
                              memory_space=pltpu.MemorySpace.VMEM,
                              pipeline_mode=pl.Buffered(1))
        b_spec = pl.BlockSpec((1, o_pad), lambda i: (0, 0),
                              memory_space=pltpu.MemorySpace.VMEM,
                              pipeline_mode=pl.Buffered(1))
    else:
        w_spec = pl.BlockSpec((f, o_pad), lambda i: (0, 0),
                              memory_space=pltpu.MemorySpace.VMEM)
        b_spec = pl.BlockSpec((1, o_pad), lambda i: (0, 0),
                              memory_space=pltpu.MemorySpace.VMEM)

    # Advisory cost: true (unpadded) work so XLA can overlap this tiny call.
    cost = pl.CostEstimate(
        flops=2 * batch * f * out_seq_len,
        transcendentals=0,
        bytes_accessed=4 * (batch * f + f * out_seq_len + out_seq_len
                            + batch * out_seq_len),
    )

    out_pad = pl.pallas_call(
        mlp_kernel,
        out_shape=jax.ShapeDtypeStruct((batch_pad, o_pad), jnp.float32),
        grid=(num_tiles,),
        in_specs=[
            # Activations: one batch tile per grid step (full array if grid=(1,)).
            pl.BlockSpec((tile_m, f), lambda i: (i, 0),
                         memory_space=pltpu.MemorySpace.VMEM),
            # Fused weight / bias: same block every step -> resident in VMEM.
            w_spec,
            b_spec,
        ],
        out_specs=pl.BlockSpec((tile_m, o_pad), lambda i: (i, 0),
                               memory_space=pltpu.MemorySpace.VMEM),
        compiler_params=pltpu.CompilerParams(
            dimension_semantics=("parallel",)),
        cost_estimate=cost,
    )(x_in, w_fused, b_fused)

    # Strip the lane padding (and batch padding if any).
    return out_pad[:batch, :out_seq_len]


def init_params(key, in_seq_len, in_dim, hidden_size, out_seq_len):
    """Deterministic init matching PyTorch nn.Linear's U(-1/sqrt(fan_in), ...).
    Weights stored transposed vs. PyTorch's (out, in) so math is x @ W."""
    f = in_seq_len * in_dim
    k1, k2, k3, k4 = jax.random.split(key, 4)
    bound1 = 1.0 / jnp.sqrt(jnp.float32(f))
    bound2 = 1.0 / jnp.sqrt(jnp.float32(hidden_size))
    w1 = jax.random.uniform(k1, (f, hidden_size), jnp.float32, -bound1, bound1)
    b1 = jax.random.uniform(k2, (1, hidden_size), jnp.float32, -bound1, bound1)
    w2 = jax.random.uniform(k3, (hidden_size, out_seq_len), jnp.float32, -bound2, bound2)
    b2 = jax.random.uniform(k4, (1, out_seq_len), jnp.float32, -bound2, bound2)
    return w1, b1, w2, b2


if __name__ == "__main__":
    # Module hyperparameters (defaults of the PyTorch MLP).
    in_seq_len = 48
    in_dim = 1
    out_seq_len = 12
    hidden_size = 64
    batch = 2

    key = jax.random.PRNGKey(0)
    kx, kp = jax.random.split(key)

    # in_dim == 1 -> input shape (batch, seq_len), as asserted in the PyTorch forward.
    x = jax.random.normal(kx, (batch, in_seq_len), jnp.float32)
    w1, b1, w2, b2 = init_params(kp, in_seq_len, in_dim, hidden_size, out_seq_len)

    # Flatten exactly like x.reshape(batch_size, -1) in the PyTorch forward.
    x_flat = x.reshape(batch, -1)

    # One-time parameter preparation (algebraic fusion + lane padding).
    # NOTE: valid only while there is no activation between the two Linears.
    w_fused, b_fused = prepare_params(w1, b1, w2, b2)

    out = jax.block_until_ready(mlp_forward(x_flat, w_fused, b_fused, out_seq_len))
    assert out.shape == (batch, out_seq_len)

    # Reference: the original two-Linear f32 math (tolerance covers MXU
    # default matmul precision and the W = w1 @ w2 reassociation).
    ref = (x_flat @ w1 + b1) @ w2 + b2
    assert jnp.allclose(out, ref, atol=2e-2, rtol=2e-2), (
        float(jnp.max(jnp.abs(out - ref))))

    print("KERNEL_OK")
</pallas_src>

<mosaic_0001>
module attributes {stable_mosaic.version = 11 : i64} {
  func.func @mlp_kernel(%arg0: i32, %arg1: memref<2x48xf32, #tpu.memory_space<vmem>>, %arg2: memref<48x128xf32, #tpu.memory_space<vmem>>, %arg3: memref<1x128xf32, #tpu.memory_space<vmem>>, %arg4: memref<2x128xf32, #tpu.memory_space<vmem>>) attributes {dimension_semantics = [#tpu.dimension_semantics<parallel>], iteration_bounds = array<i64: 1>, scalar_prefetch = 0 : i64, scratch_operands = 0 : i64, tpu.core_type = #tpu.core_type<tc>, window_params = [{transform_indices = @transform_0, window_bounds = array<i64: 2, 48>}, {pipeline_mode = #tpu.pipeline_mode<synchronous>, transform_indices = @transform_1, window_bounds = array<i64: 48, 128>}, {pipeline_mode = #tpu.pipeline_mode<synchronous>, transform_indices = @transform_2, window_bounds = array<i64: 1, 128>}, {transform_indices = @transform_3, window_bounds = array<i64: 2, 128>}]} {
    %c0 = arith.constant 0 : index
    %c0_0 = arith.constant 0 : index
    %0 = vector.load %arg1[%c0, %c0_0] : memref<2x48xf32, #tpu.memory_space<vmem>>, vector<2x48xf32>
    %c0_1 = arith.constant 0 : index
    %c0_2 = arith.constant 0 : index
    %1 = vector.load %arg2[%c0_1, %c0_2] : memref<48x128xf32, #tpu.memory_space<vmem>>, vector<48x128xf32>
    %cst = arith.constant dense<0.000000e+00> : vector<2x128xf32>
    %2 = tpu.matmul %0, %1, %cst {dimension_numbers = #tpu.dot_dimension_numbers<[1], [0], [0], [1], [0, 0, 1, 1], [], []>} : vector<2x48xf32>, vector<48x128xf32>, vector<2x128xf32> -> vector<2x128xf32>
    %c0_3 = arith.constant 0 : index
    %c0_4 = arith.constant 0 : index
    %3 = vector.load %arg3[%c0_3, %c0_4] : memref<1x128xf32, #tpu.memory_space<vmem>>, vector<1x128xf32>
    %4 = vector.broadcast %3 : vector<1x128xf32> to vector<2x128xf32>
    %5 = arith.addf %2, %4 : vector<2x128xf32>
    %c0_5 = arith.constant 0 : index
    %c0_6 = arith.constant 0 : index
    %6 = vector.load %arg4[%c0_5, %c0_6] : memref<2x128xf32, #tpu.memory_space<vmem>>, vector<2x128xf32>
    tpu.vector_store %arg4[%c0_5, %c0_6], %5 {strides = array<i32>} : memref<2x128xf32, #tpu.memory_space<vmem>>, vector<2x128xf32>,
    return
  }
  func.func @transform_0(%arg0: i32) -> (i32, i32) {
    %c0_i32 = arith.constant 0 : i32
    %c0_i32_0 = arith.constant 0 : i32
    return %arg0, %c0_i32 : i32, i32
  }
  func.func @transform_1(%arg0: i32) -> (i32, i32) {
    %c0_i32 = arith.constant 0 : i32
    %c0_i32_0 = arith.constant 0 : i32
    %c0_i32_1 = arith.constant 0 : i32
    return %c0_i32, %c0_i32_0 : i32, i32
  }
  func.func @transform_2(%arg0: i32) -> (i32, i32) {
    %c0_i32 = arith.constant 0 : i32
    %c0_i32_0 = arith.constant 0 : i32
    %c0_i32_1 = arith.constant 0 : i32
    return %c0_i32, %c0_i32_0 : i32, i32
  }
  func.func @transform_3(%arg0: i32) -> (i32, i32) {
    %c0_i32 = arith.constant 0 : i32
    %c0_i32_0 = arith.constant 0 : i32
    return %arg0, %c0_i32 : i32, i32
  }
}

</mosaic_0001>

<llo_original>
// kernel: mlp_forward.1
$region0: #{mlp_forward.1}
  #allocation0 [shape = 'u32[]', space=smem, size = 0x4, offset = 0x4, fixed_abs, tag = 'smem constant byte address 0x4 - core index']
  #allocation1 [shape = 'u32[144,128]{1,0:T(1,128)}', space=vmem, size = 0x12000, scoped, tag = 'internal scratch']
  %s0 = inlined_call_operand.hbm [shape: f32[2,48], index: 0, kind: input, shape index: {}]
  %s1 = inlined_call_operand.hbm [shape: f32[48,128], index: 1, kind: input, shape index: {}]
  %s2 = inlined_call_operand.vmem [shape: f32[1,128], index: 2, kind: input, shape index: {}]
  %s3 = inlined_call_operand.hbm [shape: f32[2,128], index: 3, kind: output, shape index: {}]
  %s4 = sld [smem:[#allocation0]]
  $region30: #{mlp_forward.1} parent=0
    _
  %s6 = ssub.s32 1, %s4
  %s7 = scalar_select 0, %s6, %s4
  $region1: #{mlp_forward.1} parent=0
    #allocation2 [shape = 'u8[1024]{0}', space=vmem, size = 0x400, scoped, tag = 'input window, operand 0, single buffered']
    #allocation3 [shape = 's32[1]{0}', space=sflag, size = 0x4, scoped, tag = 'scoped memory for mlp_forward.1']
    #allocation4 [shape = 's32[1]{0}', space=sflag, size = 0x4, scoped, tag = 'scoped memory for mlp_forward.1']
    #allocation5 [shape = 'u8[24576]{0}', space=vmem, size = 0x6000, scoped, tag = 'input window, operand 1, single buffered']
    #allocation6 [shape = 's32[1]{0}', space=sflag, size = 0x4, scoped, tag = 'scoped memory for mlp_forward.1']
    #allocation7 [shape = 'u8[1024]{0}', space=vmem, size = 0x400, scoped, tag = 'output window, operand 0, single buffered']
    %8 = vsyncpa [#allocation3], 0
    %9 = vsyncpa [#allocation6], 0
    %10 = vsyncpa [#allocation4], 0
    // Predicated region
    $region2: #{mlp_forward.1} parent=1 // pred_check
      _
    $region3: #{mlp_forward.1} parent=1 // pred_check_branch
      %12 = sbr.rel (0) target = $region5
    $region4: #{mlp_forward.1} parent=1 // pred_region
      %s14 = ssub.s32 32, 32
      %15 = vsyncadd [#allocation3], %s14
      %s17 = sshll.u32 [#allocation2], 4
      %s18 = int_to_ptr.vmem [resolvable:$true] %s17
      %20 = dma.hbm_to_vmem [thread:$0]  %s0, 32, %s18, [#allocation3]
    $region5: #{mlp_forward.1} parent=1 // pred_fallthru
      _
    // Predicated region
    $region6: #{mlp_forward.1} parent=1 // pred_check
      _
    $region7: #{mlp_forward.1} parent=1 // pred_check_branch
      %22 = sbr.rel (0) target = $region9
    $region8: #{mlp_forward.1} parent=1 // pred_region
      %s24 = ssub.s32 768, 768
      %25 = vsyncadd [#allocation6], %s24
      %s26 = sshll.u32 [#allocation5], 4
      %s27 = int_to_ptr.vmem [resolvable:$true] %s26
      %32 = dma.hbm_to_vmem [thread:$0]  %s1, 768, %s27, [#allocation6], 128, 128, 8
    $region9: #{mlp_forward.1} parent=1 // pred_fallthru
      _
    // Predicated region
    $region10: #{mlp_forward.1} parent=1 // pred_check
      _
    $region11: #{mlp_forward.1} parent=1 // pred_check_branch
      %34 = sbr.rel (0) target = $region13
    $region12: #{mlp_forward.1} parent=1 // pred_region
      _
    $region13: #{mlp_forward.1} parent=1 // pred_fallthru
      _
    // Predicated region
    $region14: #{mlp_forward.1} parent=1 // pred_check
      _
    $region15: #{mlp_forward.1} parent=1 // pred_check_branch
      %36 = sbr.rel (0) target = $region17
    $region16: #{mlp_forward.1} parent=1 // pred_region
      %37 = dma.done [#allocation3], 32
    $region17: #{mlp_forward.1} parent=1 // pred_fallthru
      _
    // Predicated region
    $region18: #{mlp_forward.1} parent=1 // pred_check
      _
    $region19: #{mlp_forward.1} parent=1 // pred_check_branch
      %39 = sbr.rel (0) target = $region21
    $region20: #{mlp_forward.1} parent=1 // pred_region
      %40 = dma.done [#allocation6], 768
    $region21: #{mlp_forward.1} parent=1 // pred_fallthru
      _
    %v41 = vld [vmem:[#allocation2] sm:$0x3]
    %v42 = vld [vmem:[#allocation5] sm:$0xff]
    %v43 = vld [vmem:[#allocation5 + $0x8] sm:$0xff]
    %v44 = vld [vmem:[#allocation5 + $0x10] sm:$0xff]
    %v45 = vld [vmem:[#allocation5 + $0x18] sm:$0xff]
    %v46 = vld [vmem:[#allocation5 + $0x20] sm:$0xff]
    %v47 = vld [vmem:[#allocation5 + $0x28] sm:$0xff]
    %v48 = vld [vmem:[%s2] sm:$0x1]
    %v50 = vlaneseq
    %v51 = vshrl.u32 %v50, 7
    %v52 = vsub.s32 0, %v51
    %v53 = vrot.slane %v48, %v52
    %vm55 = vcmask 392192
    %v57 = vsel %vm55, %v41, 0
    %59 = vmatprep.subr.mxu0 0.0
    %60 = vmatpush1.msra.mxu0 0.0
    %61 = vmatprep.subr.mxu0 0.0
    %62 = vmatpush1.msra.mxu0 0.0
    %63 = vmatprep.subr.mxu0 0.0
    %64 = vmatpush1.msra.mxu0 0.0
    %65 = vmatprep.subr.mxu0 0.0
    %66 = vmatpush1.msra.mxu0 0.0
    %67 = vmatprep.subr.mxu0 0.0
    %68 = vmatpush1.msra.mxu0 0.0
    %69 = vmatprep.subr.mxu0 0.0
    %70 = vmatpush1.msra.mxu0 0.0
    %71 = vmatprep.subr.mxu0 0.0
    %72 = vmatpush1.msra.mxu0 0.0
    %73 = vmatprep.subr.mxu0 0.0
    %74 = vmatpush1.msra.mxu0 0.0
    %75 = vmatprep.subr.mxu0 0.0
    %76 = vmatpush1.msra.mxu0 0.0
    %77 = vmatprep.subr.mxu0 0.0
    %78 = vmatpush1.msra.mxu0 0.0
    %79 = vmatprep.subr.mxu0 0.0
    %80 = vmatpush1.msra.mxu0 %v47
    %81 = vmatprep.subr.mxu0 0.0
    %82 = vmatpush1.msra.mxu0 %v46
    %83 = vmatprep.subr.mxu0 0.0
    %84 = vmatpush1.msra.mxu0 %v45
    %85 = vmatprep.subr.mxu0 0.0
    %86 = vmatpush1.msra.mxu0 %v44
    %87 = vmatprep.subr.mxu0 0.0
    %88 = vmatpush1.msra.mxu0 %v43
    %89 = vmatprep.subr.mxu0 0.0
    %90 = vmatpush1.msra.mxu0 %v42
    %91 = vmatprep.subr.mxu0 0.0
    %92 = vmatpush2.msra.mxu0 0.0
    %93 = vmatprep.subr.mxu0 0.0
    %94 = vmatpush2.msra.mxu0 0.0
    %95 = vmatprep.subr.mxu0 0.0
    %96 = vmatpush2.msra.mxu0 0.0
    %97 = vmatprep.subr.mxu0 0.0
    %98 = vmatpush2.msra.mxu0 0.0
    %99 = vmatprep.subr.mxu0 0.0
    %100 = vmatpush2.msra.mxu0 0.0
    %101 = vmatprep.subr.mxu0 0.0
    %102 = vmatpush2.msra.mxu0 0.0
    %103 = vmatprep.subr.mxu0 0.0
    %104 = vmatpush2.msra.mxu0 0.0
    %105 = vmatprep.subr.mxu0 0.0
    %106 = vmatpush2.msra.mxu0 0.0
    %107 = vmatprep.subr.mxu0 0.0
    %108 = vmatpush2.msra.mxu0 0.0
    %109 = vmatprep.subr.mxu0 0.0
    %110 = vmatpush2.msra.mxu0 0.0
    %111 = vmatprep.subr.mxu0 0.0
    %112 = vmatpush2.msra.mxu0 0.0
    %113 = vmatprep.subr.mxu0 0.0
    %114 = vmatpush2.msra.mxu0 0.0
    %115 = vmatprep.subr.mxu0 0.0
    %116 = vmatpush2.msra.mxu0 0.0
    %117 = vmatprep.subr.mxu0 0.0
    %118 = vmatpush2.msra.mxu0 0.0
    %119 = vmatprep.subr.mxu0 0.0
    %120 = vmatpush2.msra.mxu0 0.0
    %121 = vmatprep.subr.mxu0 0.0
    %122 = vmatpush2.msra.mxu0 0.0
    %123 = vmatprep.mubr.f32.mxu0 0.0
    %124 = vmatmul.mubr.f32.gmra.mxu0 %v57
    %v125 = vpop.f32.mrf.mxu0
    %v126 = vadd.f32 %v53, %v125
    %v127 = vpop.f32.mrf.mxu0
    %128 = vdwg.mxu0
    %129 = vst [vmem:[#allocation7] sm:$0x3] %v126
    // Predicated region
    $region22: #{mlp_forward.1} parent=1 // pred_check
      _
    $region23: #{mlp_forward.1} parent=1 // pred_check_branch
      %131 = sbr.rel (0) target = $region25
    $region24: #{mlp_forward.1} parent=1 // pred_region
      %s133 = ssub.s32 32, 32
      %134 = vsyncadd [#allocation4], %s133
      %s136 = sshll.u32 [#allocation7], 4
      %s137 = int_to_ptr.vmem [resolvable:$true] %s136
      %139 = dma.vmem_to_hbm [thread:$0]  %s137, 32, %s3, [#allocation4]
    $region25: #{mlp_forward.1} parent=1 // pred_fallthru
      _
    // Predicated region
    $region26: #{mlp_forward.1} parent=1 // pred_check
      _
    $region27: #{mlp_forward.1} parent=1 // pred_check_branch
      %141 = sbr.rel (0) target = $region29
    $region28: #{mlp_forward.1} parent=1 // pred_region
      %142 = dma.done [#allocation4], 32
    $region29: #{mlp_forward.1} parent=1 // pred_fallthru
      _
    %143 = vsyncpa [#allocation3], 1
    %144 = vsyncpa [#allocation6], 1
    %145 = vsyncpa [#allocation4], 1

</llo_original>
